<compile_context>
chip_gen: v6e
topology: v6e:2x2x1
jax: 0.10.0
libtpu: 0.0.40
codegen_flags: <defaults>
</compile_context>

<pallas_src>
from typing import NamedTuple

import jax
import jax.numpy as jnp
from jax import lax
from jax.experimental import pallas as pl
from jax.experimental.pallas import tpu as pltpu


def _round_up(n, m):
    return ((n + m - 1) // m) * m


class SlabLayout(NamedTuple):
    in_dim: int    # A + L + S (real concat width)
    in_pad: int    # in_dim rounded up to a multiple of 8
    hidden: int    # H
    off_b1: int
    off_w2: int
    off_b2: int
    off_w3: int
    off_b3: int
    total_rows: int


# --------------------------------------------------------------------------
# Kernel
# --------------------------------------------------------------------------
def _make_double_critic_kernel(layout: SlabLayout):
    in_pad, H = layout.in_pad, layout.hidden
    off_b1, off_w2 = layout.off_b1, layout.off_w2
    off_b2, off_w3, off_b3 = layout.off_b2, layout.off_w3, layout.off_b3

    def kernel(x_ref, w_ref, out_ref):
        # x_ref : (tile_b, in_pad) activations (zero-padded cols beyond in_dim)
        # w_ref : (total_rows, H) packed weight slab (resident; static slices)
        # out_ref: (2, tile_b) -- row 0 = q1, row 1 = q2, batch on the lane axis
        x = x_ref[...]

        w1 = w_ref[0:in_pad, :]                    # (in_pad, H)
        b1 = w_ref[off_b1:off_b1 + 1, :]           # (1, H)
        w2 = w_ref[off_w2:off_w2 + H, :]           # (H, H)
        b2 = w_ref[off_b2:off_b2 + 1, :]           # (1, H)
        w3t = w_ref[off_w3:off_w3 + 2, :]          # (2, H)  rows = [q1, q2] final weights
        b3 = w_ref[off_b3:off_b3 + 2, 0:1]         # (2, 1)  col 0 = final biases

        # Shared trunk (the torch module applies self.q1 for both outputs).
        h = jnp.dot(x, w1, preferred_element_type=jnp.float32) + b1
        h = jnp.maximum(h, 0.0)
        h = jnp.dot(h, w2, preferred_element_type=jnp.float32) + b2
        h = jnp.maximum(h, 0.0)

        # (2,H) contract H against (tile_b,H) -> (2, tile_b): both heads in one
        # dot, batch lives on the lane axis of the output.
        q = lax.dot_general(w3t, h, (((1,), (1,)), ((), ())),
                            preferred_element_type=jnp.float32) + b3
        out_ref[...] = q

    return kernel


# --------------------------------------------------------------------------
# One-time host-side parameter packing
# --------------------------------------------------------------------------
def pack_double_critic_params(q1_raw):
    """Pack the (shared) q1 network into one f32 slab with 8-row-aligned sections.

    q1_raw = (w1 (in_dim,H), b1 (1,H), w2 (H,H), b2 (1,H), w3 (H,1), b3 (1,1)).
    Section layout (rows):
      [0, in_pad)            W1 (zero-padded rows beyond in_dim)
      [off_b1, +8)           row 0 = b1
      [off_w2, +H)           W2
      [off_b2, +8)           row 0 = b2
      [off_w3, +8)           rows 0,1 = W3^T for heads 1,2 (identical: torch bug preserved)
      [off_b3, +8)           col 0 rows 0,1 = b3 for heads 1,2
    """
    w1, b1, w2, b2, w3, b3 = q1_raw
    in_dim, hidden = w1.shape
    assert hidden % 8 == 0, "hidden_units must be a multiple of 8"
    in_pad = _round_up(in_dim, 8)

    off_b1 = in_pad
    off_w2 = off_b1 + 8
    off_b2 = off_w2 + hidden
    off_w3 = off_b2 + 8
    off_b3 = off_w3 + 8
    total = off_b3 + 8

    w3_row = jnp.reshape(w3, (hidden,))
    b3_val = jnp.reshape(b3, ())

    slab = jnp.zeros((total, hidden), jnp.float32)
    slab = slab.at[0:in_dim, :].set(w1.astype(jnp.float32))
    slab = slab.at[off_b1, :].set(jnp.reshape(b1, (hidden,)).astype(jnp.float32))
    slab = slab.at[off_w2:off_w2 + hidden, :].set(w2.astype(jnp.float32))
    slab = slab.at[off_b2, :].set(jnp.reshape(b2, (hidden,)).astype(jnp.float32))
    # Both output rows use the SAME q1 head: faithful to the torch forward,
    # which computes q2 with self.q1.
    slab = slab.at[off_w3, :].set(w3_row)
    slab = slab.at[off_w3 + 1, :].set(w3_row)
    slab = slab.at[off_b3, 0].set(b3_val)
    slab = slab.at[off_b3 + 1, 0].set(b3_val)
    # TODO(synk): for genuinely distinct q1/q2 heads, pack W1->(in,2H),
    #             W2->block-diag (2H,2H), W3^T->(2,2H) instead (still 3 dots).

    layout = SlabLayout(in_dim=in_dim, in_pad=in_pad, hidden=hidden,
                        off_b1=off_b1, off_w2=off_w2, off_b2=off_b2,
                        off_w3=off_w3, off_b3=off_b3, total_rows=total)
    return slab, layout


# --------------------------------------------------------------------------
# Wrapper
# --------------------------------------------------------------------------
def _choose_tile(B):
    if B <= 128:
        return B, B  # single block, no padding
    # >=2 grid steps at large B (gives both v7x TensorCores work); tiles are
    # multiples of 128 so the (2, tile_b) output block stores stay unmasked,
    # and capped at 512 rows (amortizes ~0.35us/step on v5e/v6e; VMEM is never
    # the limiter for this kernel on any generation).
    tile_b = min(512, _round_up(pl.cdiv(B, 2), 128))
    b_pad = pl.cdiv(B, tile_b) * tile_b
    return tile_b, b_pad


def double_critic_forward_pallas(action_state, slab, layout: SlabLayout):
    """action_state: (B, A+L+S) float32.  Returns (q1, q2), each (B, 1) float32."""
    B, in_dim = action_state.shape
    assert in_dim == layout.in_dim
    tile_b, b_pad = _choose_tile(B)

    x = action_state
    if b_pad != B or layout.in_pad != in_dim:
        x = jnp.pad(x, ((0, b_pad - B), (0, layout.in_pad - in_dim)))

    kernel = _make_double_critic_kernel(layout)

    out = pl.pallas_call(
        kernel,
        out_shape=jax.ShapeDtypeStruct((2, b_pad), jnp.float32),
        grid_spec=pltpu.PrefetchScalarGridSpec(
            num_scalar_prefetch=0,
            grid=(b_pad // tile_b,),
            in_specs=[
                pl.BlockSpec((tile_b, layout.in_pad), lambda i: (i, 0)),  # row tile
                pl.BlockSpec(slab.shape, lambda i: (0, 0)),               # resident weights
            ],
            out_specs=pl.BlockSpec((2, tile_b), lambda i: (0, i)),
        ),
        compiler_params=pltpu.CompilerParams(
            dimension_semantics=("parallel",)),
    )(x, slab)

    q1 = out[0, :B][:, None]
    q2 = out[1, :B][:, None]
    return q1, q2


# --------------------------------------------------------------------------
# Module-level forward (DoubleCritic.forward semantics, encoder=None)
# --------------------------------------------------------------------------
def double_critic_apply(state, action, slab, layout: SlabLayout, training=False):
    low = state["low_dim_states"].astype(jnp.float32)
    soc = state["social_vehicles"].astype(jnp.float32)
    B = low.shape[0]
    social_flat = soc.reshape(B, -1)
    # cat((action.float(), low_dim_state, social_flat), dim=1); the 32-float/row
    # concat is negligible and fuses in XLA.
    action_state = jnp.concatenate(
        [action.astype(jnp.float32), low, social_flat], axis=1)
    q1, q2 = double_critic_forward_pallas(action_state, slab, layout)
    aux_losses = {}
    # TODO(synk): social_feature_encoder path not implemented (None in this config).
    if training:
        return q1, q2, aux_losses
    return q1, q2


# --------------------------------------------------------------------------
# Parameter construction (matches torch.nn.Linear default init)
# --------------------------------------------------------------------------
def init_linear(key, fan_in, fan_out):
    kw, kb = jax.random.split(key)
    bound = 1.0 / (fan_in ** 0.5)
    w = jax.random.uniform(kw, (fan_in, fan_out), jnp.float32, -bound, bound)
    b = jax.random.uniform(kb, (1, fan_out), jnp.float32, -bound, bound)
    return w, b


def init_qnet(key, state_size, action_size, hidden_units):
    k1, k2, k3 = jax.random.split(key, 3)
    w1, b1 = init_linear(k1, state_size + action_size, hidden_units)
    w2, b2 = init_linear(k2, hidden_units, hidden_units)
    w3, b3 = init_linear(k3, hidden_units, 1)
    return (w1, b1, w2, b2, w3, b3)


# --------------------------------------------------------------------------
# Pure-JAX reference of the torch forward (correctness check)
# --------------------------------------------------------------------------
def _mlp_ref(p, x):
    w1, b1, w2, b2, w3, b3 = p
    h = jnp.maximum(x @ w1 + b1, 0.0)
    h = jnp.maximum(h @ w2 + b2, 0.0)
    return h @ w3 + b3


def reference_forward(state, action, q1_raw):
    low = state["low_dim_states"]
    soc = state["social_vehicles"]
    B = low.shape[0]
    social_flat = soc.reshape(B, -1)
    action_state = jnp.concatenate(
        [action.astype(jnp.float32), low, social_flat], axis=1)
    q1 = _mlp_ref(q1_raw, action_state)
    q2 = _mlp_ref(q1_raw, action_state)   # torch source uses self.q1 twice
    return q1, q2


# --------------------------------------------------------------------------
if __name__ == "__main__":
    key = jax.random.PRNGKey(0)
    k_low, k_soc, k_act, k_q1 = jax.random.split(key, 4)

    # Small shapes consistent with the module
    B = 2
    low_dim = 8
    n_social, social_feat = 5, 4                     # social_vehicles: (B, 5, 4)
    state_size = low_dim + n_social * social_feat    # 28
    action_size = 4
    hidden_units = 32

    low_dim_states = jax.random.normal(k_low, (B, low_dim), jnp.float32)
    social_vehicles = jax.random.normal(k_soc, (B, n_social, social_feat), jnp.float32)
    action = jax.nn.one_hot(
        jax.random.randint(k_act, (B,), 0, action_size), action_size,
        dtype=jnp.float32)

    q1_raw = init_qnet(k_q1, state_size, action_size, hidden_units)

    # One-time host prep: pack shared-trunk weights into a single aligned slab.
    slab, layout = pack_double_critic_params(q1_raw)

    state = {"low_dim_states": low_dim_states, "social_vehicles": social_vehicles}

    apply_fn = jax.jit(lambda s, a, w: double_critic_apply(s, a, w, layout))
    q1, q2 = apply_fn(state, action, slab)
    jax.block_until_ready((q1, q2))

    # Correctness vs. pure-JAX reference of the torch forward
    q1_ref, q2_ref = reference_forward(state, action, q1_raw)
    assert q1.shape == (B, 1) and q2.shape == (B, 1)
    assert jnp.allclose(q1, q1_ref, atol=1e-4, rtol=1e-4), (q1, q1_ref)
    assert jnp.allclose(q2, q2_ref, atol=1e-4, rtol=1e-4), (q2, q2_ref)

    print("KERNEL_OK")
</pallas_src>

<mosaic_0001>
module attributes {stable_mosaic.version = 11 : i64} {
  func.func @kernel(%arg0: i32, %arg1: memref<2x32xf32, #tpu.memory_space<vmem>>, %arg2: memref<96x32xf32, #tpu.memory_space<vmem>>, %arg3: memref<2x2xf32, #tpu.memory_space<vmem>>) attributes {dimension_semantics = [#tpu.dimension_semantics<parallel>], iteration_bounds = array<i64: 1>, scalar_prefetch = 0 : i64, scratch_operands = 0 : i64, tpu.core_type = #tpu.core_type<tc>, window_params = [{transform_indices = @transform_0, window_bounds = array<i64: 2, 32>}, {pipeline_mode = #tpu.pipeline_mode<synchronous>, transform_indices = @transform_1, window_bounds = array<i64: 96, 32>}, {transform_indices = @transform_2, window_bounds = array<i64: 2, 2>}]} {
    %c0 = arith.constant 0 : index
    %c0_0 = arith.constant 0 : index
    %0 = vector.load %arg1[%c0, %c0_0] : memref<2x32xf32, #tpu.memory_space<vmem>>, vector<2x32xf32>
    %c0_1 = arith.constant 0 : index
    %c0_2 = arith.constant 0 : index
    %1 = vector.load %arg2[%c0_1, %c0_2] : memref<96x32xf32, #tpu.memory_space<vmem>>, vector<32x32xf32>
    %c32 = arith.constant 32 : index
    %c0_3 = arith.constant 0 : index
    %2 = vector.load %arg2[%c32, %c0_3] : memref<96x32xf32, #tpu.memory_space<vmem>>, vector<1x32xf32>
    %c40 = arith.constant 40 : index
    %c0_4 = arith.constant 0 : index
    %3 = vector.load %arg2[%c40, %c0_4] : memref<96x32xf32, #tpu.memory_space<vmem>>, vector<32x32xf32>
    %c72 = arith.constant 72 : index
    %c0_5 = arith.constant 0 : index
    %4 = vector.load %arg2[%c72, %c0_5] : memref<96x32xf32, #tpu.memory_space<vmem>>, vector<1x32xf32>
    %c80 = arith.constant 80 : index
    %c0_6 = arith.constant 0 : index
    %5 = vector.load %arg2[%c80, %c0_6] : memref<96x32xf32, #tpu.memory_space<vmem>>, vector<2x32xf32>
    %c88 = arith.constant 88 : index
    %c0_7 = arith.constant 0 : index
    %6 = vector.load %arg2[%c88, %c0_7] : memref<96x32xf32, #tpu.memory_space<vmem>>, vector<2x1xf32>
    %cst = arith.constant dense<0.000000e+00> : vector<2x32xf32>
    %7 = tpu.matmul %0, %1, %cst {dimension_numbers = #tpu.dot_dimension_numbers<[1], [0], [0], [1], [0, 0, 1, 1], [], []>} : vector<2x32xf32>, vector<32x32xf32>, vector<2x32xf32> -> vector<2x32xf32>
    %8 = vector.broadcast %2 : vector<1x32xf32> to vector<2x32xf32>
    %9 = arith.addf %7, %8 : vector<2x32xf32>
    %cst_8 = arith.constant 0.000000e+00 : f32
    %10 = vector.broadcast %cst_8 : f32 to vector<2x32xf32>
    %11 = arith.maximumf %9, %10 : vector<2x32xf32>
    %cst_9 = arith.constant dense<0.000000e+00> : vector<2x32xf32>
    %12 = tpu.matmul %11, %3, %cst_9 {dimension_numbers = #tpu.dot_dimension_numbers<[1], [0], [0], [1], [0, 0, 1, 1], [], []>} : vector<2x32xf32>, vector<32x32xf32>, vector<2x32xf32> -> vector<2x32xf32>
    %13 = vector.broadcast %4 : vector<1x32xf32> to vector<2x32xf32>
    %14 = arith.addf %12, %13 : vector<2x32xf32>
    %cst_10 = arith.constant 0.000000e+00 : f32
    %15 = vector.broadcast %cst_10 : f32 to vector<2x32xf32>
    %16 = arith.maximumf %14, %15 : vector<2x32xf32>
    %cst_11 = arith.constant dense<0.000000e+00> : vector<2x2xf32>
    %17 = tpu.matmul %5, %16, %cst_11 {dimension_numbers = #tpu.dot_dimension_numbers<[1], [1], [0], [0], [0, 0, 1, 0], [], []>} : vector<2x32xf32>, vector<2x32xf32>, vector<2x2xf32> -> vector<2x2xf32>
    %18 = vector.broadcast %6 : vector<2x1xf32> to vector<2x2xf32>
    %19 = arith.addf %17, %18 : vector<2x2xf32>
    %c0_12 = arith.constant 0 : index
    %c0_13 = arith.constant 0 : index
    %20 = vector.load %arg3[%c0_12, %c0_13] : memref<2x2xf32, #tpu.memory_space<vmem>>, vector<2x2xf32>
    tpu.vector_store %arg3[%c0_12, %c0_13], %19 {strides = array<i32>} : memref<2x2xf32, #tpu.memory_space<vmem>>, vector<2x2xf32>,
    return
  }
  func.func @transform_0(%arg0: i32) -> (i32, i32) {
    %c0_i32 = arith.constant 0 : i32
    %c0_i32_0 = arith.constant 0 : i32
    return %arg0, %c0_i32 : i32, i32
  }
  func.func @transform_1(%arg0: i32) -> (i32, i32) {
    %c0_i32 = arith.constant 0 : i32
    %c0_i32_0 = arith.constant 0 : i32
    %c0_i32_1 = arith.constant 0 : i32
    return %c0_i32, %c0_i32_0 : i32, i32
  }
  func.func @transform_2(%arg0: i32) -> (i32, i32) {
    %c0_i32 = arith.constant 0 : i32
    %c0_i32_0 = arith.constant 0 : i32
    return %c0_i32, %arg0 : i32, i32
  }
}

</mosaic_0001>

<llo_original>
// kernel: _lambda_.1
$region0: #{_lambda_.1}
  #allocation0 [shape = 'u32[]', space=smem, size = 0x4, offset = 0x4, fixed_abs, tag = 'smem constant byte address 0x4 - core index']
  #allocation1 [shape = 'u32[144,128]{1,0:T(1,128)}', space=vmem, size = 0x12000, scoped, tag = 'internal scratch']
  %s0 = inlined_call_operand.vmem [shape: f32[2,32], index: 0, kind: input, shape index: {}]
  %s1 = inlined_call_operand.vmem [shape: f32[96,32], index: 1, kind: input, shape index: {}]
  %s2 = inlined_call_operand.vmem [shape: f32[2,2], index: 2, kind: output, shape index: {}]
  %s3 = sld [smem:[#allocation0]]
  $region18: #{_lambda_.1} parent=0
    _
  %s5 = ssub.s32 1, %s3
  %s6 = scalar_select 0, %s5, %s3
  // Predicated region
  $region2: #{_lambda_.1} parent=0 // pred_check
    _
  $region3: #{_lambda_.1} parent=0 // pred_check_branch
    %8 = sbr.rel (0) target = $region5
  $region4: #{_lambda_.1} parent=0 // pred_region
    _
  $region5: #{_lambda_.1} parent=0 // pred_fallthru
    _
  // Predicated region
  $region6: #{_lambda_.1} parent=0 // pred_check
    _
  $region7: #{_lambda_.1} parent=0 // pred_check_branch
    %10 = sbr.rel (0) target = $region9
  $region8: #{_lambda_.1} parent=0 // pred_region
    _
  $region9: #{_lambda_.1} parent=0 // pred_fallthru
    _
  %v11 = vld [vmem:[%s0] sm:$0x3]
  %v12 = vld [vmem:[%s1] sm:$0xff]
  %v13 = vld [vmem:[%s1 + $0x8] sm:$0xff]
  %v14 = vld [vmem:[%s1 + $0x10] sm:$0xff]
  %v15 = vld [vmem:[%s1 + $0x18] sm:$0xff]
  %v16 = vld [vmem:[%s1 + $0x20] sm:$0x1]
  %v17 = vld [vmem:[%s1 + $0x28] sm:$0xff]
  %v18 = vld [vmem:[%s1 + $0x30] sm:$0xff]
  %v19 = vld [vmem:[%s1 + $0x38] sm:$0xff]
  %v20 = vld [vmem:[%s1 + $0x40] sm:$0xff]
  %v21 = vld [vmem:[%s1 + $0x48] sm:$0x1]
  %v22 = vld [vmem:[%s1 + $0x50] sm:$0x3]
  %v23 = vld [vmem:[%s1 + $0x58] sm:$0x3]
  %v24 = vlaneseq
  %v25 = vshrl.u32 %v24, 7
  %v26 = vsub.s32 0, %v25
  %v27 = vrot.slane %v16, %v26
  %vm28 = vcmask 261120
  %v30 = vsel %vm28, %v11, 0
  %32 = vmatprep.subr.mxu0 0.0
  %33 = vmatpush1.msra.mxu0 0.0
  %34 = vmatprep.subr.mxu0 0.0
  %35 = vmatpush1.msra.mxu0 0.0
  %36 = vmatprep.subr.mxu0 0.0
  %37 = vmatpush1.msra.mxu0 0.0
  %38 = vmatprep.subr.mxu0 0.0
  %39 = vmatpush1.msra.mxu0 0.0
  %40 = vmatprep.subr.mxu0 0.0
  %41 = vmatpush1.msra.mxu0 0.0
  %42 = vmatprep.subr.mxu0 0.0
  %43 = vmatpush1.msra.mxu0 0.0
  %44 = vmatprep.subr.mxu0 0.0
  %45 = vmatpush1.msra.mxu0 0.0
  %46 = vmatprep.subr.mxu0 0.0
  %47 = vmatpush1.msra.mxu0 0.0
  %48 = vmatprep.subr.mxu0 0.0
  %49 = vmatpush1.msra.mxu0 0.0
  %50 = vmatprep.subr.mxu0 0.0
  %51 = vmatpush1.msra.mxu0 0.0
  %52 = vmatprep.subr.mxu0 0.0
  %53 = vmatpush1.msra.mxu0 0.0
  %54 = vmatprep.subr.mxu0 0.0
  %55 = vmatpush1.msra.mxu0 0.0
  %56 = vmatprep.subr.mxu0 0.0
  %57 = vmatpush1.msra.mxu0 %v15
  %58 = vmatprep.subr.mxu0 0.0
  %59 = vmatpush1.msra.mxu0 %v14
  %60 = vmatprep.subr.mxu0 0.0
  %61 = vmatpush1.msra.mxu0 %v13
  %62 = vmatprep.subr.mxu0 0.0
  %63 = vmatpush1.msra.mxu0 %v12
  %64 = vmatprep.subr.mxu0 0.0
  %65 = vmatpush2.msra.mxu0 0.0
  %66 = vmatprep.subr.mxu0 0.0
  %67 = vmatpush2.msra.mxu0 0.0
  %68 = vmatprep.subr.mxu0 0.0
  %69 = vmatpush2.msra.mxu0 0.0
  %70 = vmatprep.subr.mxu0 0.0
  %71 = vmatpush2.msra.mxu0 0.0
  %72 = vmatprep.subr.mxu0 0.0
  %73 = vmatpush2.msra.mxu0 0.0
  %74 = vmatprep.subr.mxu0 0.0
  %75 = vmatpush2.msra.mxu0 0.0
  %76 = vmatprep.subr.mxu0 0.0
  %77 = vmatpush2.msra.mxu0 0.0
  %78 = vmatprep.subr.mxu0 0.0
  %79 = vmatpush2.msra.mxu0 0.0
  %80 = vmatprep.subr.mxu0 0.0
  %81 = vmatpush2.msra.mxu0 0.0
  %82 = vmatprep.subr.mxu0 0.0
  %83 = vmatpush2.msra.mxu0 0.0
  %84 = vmatprep.subr.mxu0 0.0
  %85 = vmatpush2.msra.mxu0 0.0
  %86 = vmatprep.subr.mxu0 0.0
  %87 = vmatpush2.msra.mxu0 0.0
  %88 = vmatprep.subr.mxu0 0.0
  %89 = vmatpush2.msra.mxu0 0.0
  %90 = vmatprep.subr.mxu0 0.0
  %91 = vmatpush2.msra.mxu0 0.0
  %92 = vmatprep.subr.mxu0 0.0
  %93 = vmatpush2.msra.mxu0 0.0
  %94 = vmatprep.subr.mxu0 0.0
  %95 = vmatpush2.msra.mxu0 0.0
  %96 = vmatprep.mubr.f32.mxu0 0.0
  %97 = vmatmul.mubr.f32.gmra.mxu0 %v30
  %v98 = vpop.f32.mrf.mxu0
  %v99 = vadd.f32 %v27, %v98
  %v100 = vpop.f32.mrf.mxu0
  %101 = vdwg.mxu0
  %v102 = vmax.f32 %v99, 0.0
  %v103 = vlaneseq
  %v104 = vshrl.u32 %v103, 7
  %v105 = vsub.s32 0, %v104
  %v106 = vrot.slane %v21, %v105
  %v108 = vsel %vm28, %v102, 0
  %110 = vmatprep.subr.mxu0 0.0
  %111 = vmatpush1.msra.mxu0 0.0
  %112 = vmatprep.subr.mxu0 0.0
  %113 = vmatpush1.msra.mxu0 0.0
  %114 = vmatprep.subr.mxu0 0.0
  %115 = vmatpush1.msra.mxu0 0.0
  %116 = vmatprep.subr.mxu0 0.0
  %117 = vmatpush1.msra.mxu0 0.0
  %118 = vmatprep.subr.mxu0 0.0
  %119 = vmatpush1.msra.mxu0 0.0
  %120 = vmatprep.subr.mxu0 0.0
  %121 = vmatpush1.msra.mxu0 0.0
  %122 = vmatprep.subr.mxu0 0.0
  %123 = vmatpush1.msra.mxu0 0.0
  %124 = vmatprep.subr.mxu0 0.0
  %125 = vmatpush1.msra.mxu0 0.0
  %126 = vmatprep.subr.mxu0 0.0
  %127 = vmatpush1.msra.mxu0 0.0
  %128 = vmatprep.subr.mxu0 0.0
  %129 = vmatpush1.msra.mxu0 0.0
  %130 = vmatprep.subr.mxu0 0.0
  %131 = vmatpush1.msra.mxu0 0.0
  %132 = vmatprep.subr.mxu0 0.0
  %133 = vmatpush1.msra.mxu0 0.0
  %134 = vmatprep.subr.mxu0 0.0
  %135 = vmatpush1.msra.mxu0 %v20
  %136 = vmatprep.subr.mxu0 0.0
  %137 = vmatpush1.msra.mxu0 %v19
  %138 = vmatprep.subr.mxu0 0.0
  %139 = vmatpush1.msra.mxu0 %v18
  %140 = vmatprep.subr.mxu0 0.0
  %141 = vmatpush1.msra.mxu0 %v17
  %142 = vmatprep.subr.mxu0 0.0
  %143 = vmatpush2.msra.mxu0 0.0
  %144 = vmatprep.subr.mxu0 0.0
  %145 = vmatpush2.msra.mxu0 0.0
  %146 = vmatprep.subr.mxu0 0.0
  %147 = vmatpush2.msra.mxu0 0.0
  %148 = vmatprep.subr.mxu0 0.0
  %149 = vmatpush2.msra.mxu0 0.0
  %150 = vmatprep.subr.mxu0 0.0
  %151 = vmatpush2.msra.mxu0 0.0
  %152 = vmatprep.subr.mxu0 0.0
  %153 = vmatpush2.msra.mxu0 0.0
  %154 = vmatprep.subr.mxu0 0.0
  %155 = vmatpush2.msra.mxu0 0.0
  %156 = vmatprep.subr.mxu0 0.0
  %157 = vmatpush2.msra.mxu0 0.0
  %158 = vmatprep.subr.mxu0 0.0
  %159 = vmatpush2.msra.mxu0 0.0
  %160 = vmatprep.subr.mxu0 0.0
  %161 = vmatpush2.msra.mxu0 0.0
  %162 = vmatprep.subr.mxu0 0.0
  %163 = vmatpush2.msra.mxu0 0.0
  %164 = vmatprep.subr.mxu0 0.0
  %165 = vmatpush2.msra.mxu0 0.0
  %166 = vmatprep.subr.mxu0 0.0
  %167 = vmatpush2.msra.mxu0 0.0
  %168 = vmatprep.subr.mxu0 0.0
  %169 = vmatpush2.msra.mxu0 0.0
  %170 = vmatprep.subr.mxu0 0.0
  %171 = vmatpush2.msra.mxu0 0.0
  %172 = vmatprep.subr.mxu0 0.0
  %173 = vmatpush2.msra.mxu0 0.0
  %174 = vmatprep.mubr.f32.mxu0 0.0
  %175 = vmatmul.mubr.f32.gmra.mxu0 %v108
  %v176 = vpop.f32.mrf.mxu0
  %v177 = vadd.f32 %v106, %v176
  %v178 = vpop.f32.mrf.mxu0
  %179 = vdwg.mxu0
  %v180 = vmax.f32 %v177, 0.0
  %182 = vset.pattern.permute.xlu0 0
  %183 = vperm.xlu0 %182, %v23
  %v184 = vpop.permute.xlu0 %183
  %v187 = vsel %vm28, %v22, 0
  %v190 = vsel %vm28, %v180, 0
  %192 = vmatprep.subr.mxu0 0.0
  %193 = vmatpush1.xpose.msra.mxu0 0.0
  %194 = vmatprep.subr.mxu0 0.0
  %195 = vmatpush1.xpose.msra.mxu0 0.0
  %196 = vmatprep.subr.mxu0 0.0
  %197 = vmatpush1.xpose.msra.mxu0 0.0
  %198 = vmatprep.subr.mxu0 0.0
  %199 = vmatpush1.xpose.msra.mxu0 0.0
  %200 = vmatprep.subr.mxu0 0.0
  %201 = vmatpush1.xpose.msra.mxu0 0.0
  %202 = vmatprep.subr.mxu0 0.0
  %203 = vmatpush1.xpose.msra.mxu0 0.0
  %204 = vmatprep.subr.mxu0 0.0
  %205 = vmatpush1.xpose.msra.mxu0 0.0
  %206 = vmatprep.subr.mxu0 0.0
  %207 = vmatpush1.xpose.msra.mxu0 0.0
  %208 = vmatprep.subr.mxu0 0.0
  %209 = vmatpush1.xpose.msra.mxu0 0.0
  %210 = vmatprep.subr.mxu0 0.0
  %211 = vmatpush1.xpose.msra.mxu0 0.0
  %212 = vmatprep.subr.mxu0 0.0
  %213 = vmatpush1.xpose.msra.mxu0 0.0
  %214 = vmatprep.subr.mxu0 0.0
  %215 = vmatpush1.xpose.msra.mxu0 0.0
  %216 = vmatprep.subr.mxu0 0.0
  %217 = vmatpush1.xpose.msra.mxu0 0.0
  %218 = vmatprep.subr.mxu0 0.0
  %219 = vmatpush1.xpose.msra.mxu0 0.0
  %220 = vmatprep.subr.mxu0 0.0
  %221 = vmatpush1.xpose.msra.mxu0 0.0
  %222 = vmatprep.subr.mxu0 0.0
  %223 = vmatpush1.xpose.msra.mxu0 %v190
  %224 = vmatprep.subr.mxu0 0.0
  %225 = vmatpush2.xpose.msra.mxu0 0.0
  %226 = vmatprep.subr.mxu0 0.0
  %227 = vmatpush2.xpose.msra.mxu0 0.0
  %228 = vmatprep.subr.mxu0 0.0
  %229 = vmatpush2.xpose.msra.mxu0 0.0
  %230 = vmatprep.subr.mxu0 0.0
  %231 = vmatpush2.xpose.msra.mxu0 0.0
  %232 = vmatprep.subr.mxu0 0.0
  %233 = vmatpush2.xpose.msra.mxu0 0.0
  %234 = vmatprep.subr.mxu0 0.0
  %235 = vmatpush2.xpose.msra.mxu0 0.0
  %236 = vmatprep.subr.mxu0 0.0
  %237 = vmatpush2.xpose.msra.mxu0 0.0
  %238 = vmatprep.subr.mxu0 0.0
  %239 = vmatpush2.xpose.msra.mxu0 0.0
  %240 = vmatprep.subr.mxu0 0.0
  %241 = vmatpush2.xpose.msra.mxu0 0.0
  %242 = vmatprep.subr.mxu0 0.0
  %243 = vmatpush2.xpose.msra.mxu0 0.0
  %244 = vmatprep.subr.mxu0 0.0
  %245 = vmatpush2.xpose.msra.mxu0 0.0
  %246 = vmatprep.subr.mxu0 0.0
  %247 = vmatpush2.xpose.msra.mxu0 0.0
  %248 = vmatprep.subr.mxu0 0.0
  %249 = vmatpush2.xpose.msra.mxu0 0.0
  %250 = vmatprep.subr.mxu0 0.0
  %251 = vmatpush2.xpose.msra.mxu0 0.0
  %252 = vmatprep.subr.mxu0 0.0
  %253 = vmatpush2.xpose.msra.mxu0 0.0
  %254 = vmatprep.subr.mxu0 0.0
  %255 = vmatpush2.xpose.msra.mxu0 0.0
  %256 = vmatprep.mubr.f32.mxu0 0.0
  %257 = vmatmul.mubr.f32.gmra.mxu0 %v187
  %v258 = vpop.f32.mrf.mxu0
  %v259 = vadd.f32 %v184, %v258
  %v260 = vpop.f32.mrf.mxu0
  %261 = vdwg.mxu0
  %vm262 = vcmask 9216
  %263 = vst.msk [vmem:[%s2] sm:$0x3] %vm262, %v259
  // Predicated region
  $region10: #{_lambda_.1} parent=0 // pred_check
    _
  $region11: #{_lambda_.1} parent=0 // pred_check_branch
    %265 = sbr.rel (0) target = $region13
  $region12: #{_lambda_.1} parent=0 // pred_region
    _
  $region13: #{_lambda_.1} parent=0 // pred_fallthru
    _
  // Predicated region
  $region14: #{_lambda_.1} parent=0 // pred_check
    _
  $region15: #{_lambda_.1} parent=0 // pred_check_branch
    %267 = sbr.rel (0) target = $region17
  $region16: #{_lambda_.1} parent=0 // pred_region
    _
  $region17: #{_lambda_.1} parent=0 // pred_fallthru
    _

</llo_original>
